<compile_context>
chip_gen: v5e
topology: v5e:2x2
jax: 0.10.0
libtpu: 0.0.40
codegen_flags: <defaults>
</compile_context>

<pallas_src>
import functools

import jax
import jax.numpy as jnp
from jax import lax
from jax.experimental import pallas as pl
from jax.experimental.pallas import tpu as pltpu

_SUBLANES = 8
_LANES = 128
_ROW_GROUP = 32            # rows per register-resident accumulator group
_MAX_TILE_BC = 256         # allow tall blocks when H*W is small
_ITER_CAP = 64             # max (row-group x 128-lane chunk) unrolled iterations
_TARGET_BLOCK_ELEMS = 512 * 1024   # aim for ~2 MiB f32 per input block


def _round_up(n, m):
    return (n + m - 1) // m * m


def _combined_loss_kernel(x_ref, t_ref, bce_out, inter_out, denom_out,
                          acc_bce, acc_inter, acc_denom,
                          *, hw, tile_s, tile_bc, row_group,
                          n_s_blocks, col_ragged):
    j = pl.program_id(1)                     # spatial (reduction) axis, innermost
    n_chunks = tile_s // _LANES
    n_groups = tile_bc // row_group

    @pl.when(j == 0)
    def _init():
        acc_bce[...] = jnp.zeros_like(acc_bce)
        acc_inter[...] = jnp.zeros_like(acc_inter)
        acc_denom[...] = jnp.zeros_like(acc_denom)

    def accumulate(masked):
        for g in range(n_groups):
            rows = pl.ds(g * row_group, row_group)
            # Load the narrow accumulators once per grid step, carry them in
            # vregs across the unrolled chunk loop, store them once at the end.
            bce_v = acc_bce[rows, :]
            inter_v = acc_inter[rows, :]
            denom_v = acc_denom[rows, :]
            for c in range(n_chunks):
                cols = pl.ds(c * _LANES, _LANES)
                x = x_ref[rows, cols].astype(jnp.float32)
                t = t_ref[rows, cols].astype(jnp.float32)
                # One exp(-|x|) feeds the stable BCE-with-logits and sigmoid.
                e = jnp.exp(-jnp.abs(x))
                bce = jnp.maximum(x, 0.0) - x * t + jnp.log1p(e)
                r = 1.0 / (1.0 + e)
                sig = jnp.where(x >= 0.0, r, e * r)       # sigmoid(x)
                # Faithful to the module: DiceLoss applies sigmoid again.
                p = 1.0 / (1.0 + jnp.exp(-sig))           # sigmoid(sigmoid(x))
                inter = p * t
                denom = p + t                             # merged sum(p)+sum(t)
                if masked:
                    # Select-based masking: OOB garbage (possibly NaN/Inf) is
                    # dropped, never multiplied.
                    col = lax.broadcasted_iota(jnp.int32, (row_group, _LANES), 1)
                    valid = (j * tile_s + c * _LANES + col) < hw
                    bce = jnp.where(valid, bce, 0.0)
                    inter = jnp.where(valid, inter, 0.0)
                    denom = jnp.where(valid, denom, 0.0)
                bce_v = bce_v + bce
                inter_v = inter_v + inter
                denom_v = denom_v + denom
            acc_bce[rows, :] = bce_v
            acc_inter[rows, :] = inter_v
            acc_denom[rows, :] = denom_v

    # Gate the ragged-tail masking so interior steps never pay for it.
    if not col_ragged:
        accumulate(masked=False)
    elif n_s_blocks == 1:
        accumulate(masked=True)
    else:
        @pl.when(j < n_s_blocks - 1)
        def _interior():
            accumulate(masked=False)

        @pl.when(j == n_s_blocks - 1)
        def _tail():
            accumulate(masked=True)

    # Emit lane-partial sums for this (b*c)-block once per i.  Rows past
    # n_rows hold garbage; the wrapper slices them away (no row masking).
    @pl.when(j == n_s_blocks - 1)
    def _emit():
        bce_out[...] = acc_bce[...]
        inter_out[...] = acc_inter[...]
        denom_out[...] = acc_denom[...]


def combined_loss(predictions, targets, *, bce_weight=0.5, smooth=1.0):
    assert predictions.shape == targets.shape
    assert predictions.ndim == 4, "CombinedLoss expects NCHW inputs"
    b, c, h, w = predictions.shape
    n_rows = b * c
    hw = h * w
    n_elems = n_rows * hw

    # Pure views (no pad / copy); inputs stream in their native dtype (bf16
    # halves HBM traffic on v5e/v6e); math is f32 inside the kernel.
    x = predictions.reshape(n_rows, hw)
    t = targets.reshape(n_rows, hw)

    # ---- tile selection ----------------------------------------------------
    n_rows_pad = _round_up(n_rows, _SUBLANES)
    tile_bc = min(n_rows_pad, _MAX_TILE_BC)
    if tile_bc > _ROW_GROUP:
        tile_bc = (tile_bc // _ROW_GROUP) * _ROW_GROUP
    row_group = min(tile_bc, _ROW_GROUP)
    n_groups = tile_bc // row_group

    max_chunks = max(1, _ITER_CAP // n_groups)
    tile_s = min(
        _round_up(hw, _LANES),
        max_chunks * _LANES,
        _round_up(pl.cdiv(_TARGET_BLOCK_ELEMS, tile_bc), _LANES),
    )

    n_bc_blocks = pl.cdiv(n_rows, tile_bc)
    n_s_blocks = pl.cdiv(hw, tile_s)
    col_ragged = (hw % tile_s) != 0

    kernel = functools.partial(
        _combined_loss_kernel,
        hw=hw, tile_s=tile_s, tile_bc=tile_bc, row_group=row_group,
        n_s_blocks=n_s_blocks, col_ragged=col_ragged,
    )

    # Deeper input buffering only pays on long grids (hides residual DMA
    # exposure); keep the default double-buffering otherwise.
    if n_bc_blocks * n_s_blocks >= 4:
        in_specs = [
            pl.BlockSpec((tile_bc, tile_s), lambda i, j: (i, j),
                         pipeline_mode=pl.Buffered(3)),
            pl.BlockSpec((tile_bc, tile_s), lambda i, j: (i, j),
                         pipeline_mode=pl.Buffered(3)),
        ]
    else:
        in_specs = [
            pl.BlockSpec((tile_bc, tile_s), lambda i, j: (i, j)),
            pl.BlockSpec((tile_bc, tile_s), lambda i, j: (i, j)),
        ]

    out_rows = n_bc_blocks * tile_bc
    part_shape = jax.ShapeDtypeStruct((out_rows, _LANES), jnp.float32)
    out_spec = pl.BlockSpec((tile_bc, _LANES), lambda i, j: (i, 0))

    bce_p, inter_p, denom_p = pl.pallas_call(
        kernel,
        out_shape=(part_shape, part_shape, part_shape),
        grid_spec=pltpu.PrefetchScalarGridSpec(
            num_scalar_prefetch=0,
            grid=(n_bc_blocks, n_s_blocks),
            in_specs=in_specs,
            out_specs=(out_spec, out_spec, out_spec),
            scratch_shapes=[
                pltpu.VMEM((tile_bc, _LANES), jnp.float32),   # bce partials
                pltpu.VMEM((tile_bc, _LANES), jnp.float32),   # sum(p*t) partials
                pltpu.VMEM((tile_bc, _LANES), jnp.float32),   # sum(p)+sum(t)
            ],
        ),
        compiler_params=pltpu.CompilerParams(
            # (b*c)-blocks are independent -> parallel (v7x 2-TC sharding);
            # the spatial axis is the reduction -> arbitrary, innermost.
            dimension_semantics=("parallel", "arbitrary"),
            vmem_limit_bytes=32 * 1024 * 1024,
        ),
    )(x, t)

    # Tiny wrapper-side epilogue: drop padded rows, finish the reductions.
    bce_mean = jnp.sum(bce_p[:n_rows, :]) / float(n_elems)
    inter_rows = jnp.sum(inter_p[:n_rows, :], axis=1)
    denom_rows = jnp.sum(denom_p[:n_rows, :], axis=1)
    dice_rows = 1.0 - (2.0 * inter_rows + smooth) / (denom_rows + smooth)
    dice_mean = jnp.mean(dice_rows)
    return bce_weight * bce_mean + (1.0 - bce_weight) * dice_mean


def _reference(predictions, targets, *, bce_weight=0.5, smooth=1.0):
    x = predictions.astype(jnp.float32)
    t = targets.astype(jnp.float32)
    bce_elem = jnp.maximum(x, 0.0) - x * t + jnp.log1p(jnp.exp(-jnp.abs(x)))
    bce = jnp.mean(bce_elem)
    p = jax.nn.sigmoid(x)          # CombinedLoss.forward
    p = jax.nn.sigmoid(p)          # DiceLoss.forward applies sigmoid again
    bdim, cdim = x.shape[0], x.shape[1]
    pf = p.reshape(bdim, cdim, -1)
    tf = t.reshape(bdim, cdim, -1)
    inter = jnp.sum(pf * tf, axis=2)
    dice = 1.0 - (2.0 * inter + smooth) / (
        jnp.sum(pf, axis=2) + jnp.sum(tf, axis=2) + smooth)
    return bce_weight * bce + (1.0 - bce_weight) * jnp.mean(dice)


if __name__ == "__main__":
    key = jax.random.PRNGKey(0)
    # NCHW logits + binary target masks.  Shapes cover: aligned single-step,
    # ragged H*W / B*C (masked path), and a multi-spatial-block reduction with
    # a ragged tail (interior + tail masked paths, cross-step accumulation).
    shapes = [(2, 4, 16, 16), (2, 3, 7, 9), (1, 2, 96, 96)]
    for idx, shape in enumerate(shapes):
        kp, kt = jax.random.split(jax.random.fold_in(key, idx))
        predictions = jax.random.normal(kp, shape, dtype=jnp.float32)
        targets = (jax.random.uniform(kt, shape) > 0.5).astype(jnp.float32)

        loss = combined_loss(predictions, targets)
        jax.block_until_ready(loss)

        ref = _reference(predictions, targets)
        assert jnp.allclose(loss, ref, rtol=1e-5, atol=1e-5), (shape, loss, ref)

    print("KERNEL_OK")
</pallas_src>

<mosaic_0001>
module attributes {stable_mosaic.version = 11 : i64} {
  func.func @_combined_loss_kernel(%arg0: i32, %arg1: i32, %arg2: memref<8x256xf32, #tpu.memory_space<vmem>>, %arg3: memref<8x256xf32, #tpu.memory_space<vmem>>, %arg4: memref<8x128xf32, #tpu.memory_space<vmem>>, %arg5: memref<8x128xf32, #tpu.memory_space<vmem>>, %arg6: memref<8x128xf32, #tpu.memory_space<vmem>>, %arg7: memref<8x128xf32, #tpu.memory_space<vmem>>, %arg8: memref<8x128xf32, #tpu.memory_space<vmem>>, %arg9: memref<8x128xf32, #tpu.memory_space<vmem>>) attributes {dimension_semantics = [#tpu.dimension_semantics<parallel>, #tpu.dimension_semantics<arbitrary>], iteration_bounds = array<i64: 1, 1>, scalar_prefetch = 0 : i64, scratch_operands = 3 : i64, tpu.core_type = #tpu.core_type<tc>, window_params = [{transform_indices = @transform_0, window_bounds = array<i64: 8, 256>}, {transform_indices = @transform_1, window_bounds = array<i64: 8, 256>}, {transform_indices = @transform_2, window_bounds = array<i64: 8, 128>}, {transform_indices = @transform_3, window_bounds = array<i64: 8, 128>}, {transform_indices = @transform_4, window_bounds = array<i64: 8, 128>}]} {
    %c0_i32 = arith.constant 0 : i32
    %0 = arith.cmpi eq, %arg1, %c0_i32 : i32
    %1 = arith.extui %0 : i1 to i32
    %c0_i32_0 = arith.constant 0 : i32
    %2 = arith.cmpi ne, %1, %c0_i32_0 : i32
    scf.if %2 {
      %cst_36 = arith.constant 0.000000e+00 : f32
      %76 = vector.broadcast %cst_36 : f32 to vector<8x128xf32>
      %c0_37 = arith.constant 0 : index
      %c0_38 = arith.constant 0 : index
      %77 = vector.load %arg7[%c0_37, %c0_38] : memref<8x128xf32, #tpu.memory_space<vmem>>, vector<8x128xf32>
      tpu.vector_store %arg7[%c0_37, %c0_38], %76 {strides = array<i32>} : memref<8x128xf32, #tpu.memory_space<vmem>>, vector<8x128xf32>,
      %cst_39 = arith.constant 0.000000e+00 : f32
      %78 = vector.broadcast %cst_39 : f32 to vector<8x128xf32>
      %c0_40 = arith.constant 0 : index
      %c0_41 = arith.constant 0 : index
      %79 = vector.load %arg8[%c0_40, %c0_41] : memref<8x128xf32, #tpu.memory_space<vmem>>, vector<8x128xf32>
      tpu.vector_store %arg8[%c0_40, %c0_41], %78 {strides = array<i32>} : memref<8x128xf32, #tpu.memory_space<vmem>>, vector<8x128xf32>,
      %cst_42 = arith.constant 0.000000e+00 : f32
      %80 = vector.broadcast %cst_42 : f32 to vector<8x128xf32>
      %c0_43 = arith.constant 0 : index
      %c0_44 = arith.constant 0 : index
      %81 = vector.load %arg9[%c0_43, %c0_44] : memref<8x128xf32, #tpu.memory_space<vmem>>, vector<8x128xf32>
      tpu.vector_store %arg9[%c0_43, %c0_44], %80 {strides = array<i32>} : memref<8x128xf32, #tpu.memory_space<vmem>>, vector<8x128xf32>,
    } else {
    }
    %c0 = arith.constant 0 : index
    %c0_1 = arith.constant 0 : index
    %3 = vector.load %arg7[%c0, %c0_1] : memref<8x128xf32, #tpu.memory_space<vmem>>, vector<8x128xf32>
    %c0_2 = arith.constant 0 : index
    %c0_3 = arith.constant 0 : index
    %4 = vector.load %arg8[%c0_2, %c0_3] : memref<8x128xf32, #tpu.memory_space<vmem>>, vector<8x128xf32>
    %c0_4 = arith.constant 0 : index
    %c0_5 = arith.constant 0 : index
    %5 = vector.load %arg9[%c0_4, %c0_5] : memref<8x128xf32, #tpu.memory_space<vmem>>, vector<8x128xf32>
    %c0_6 = arith.constant 0 : index
    %c0_7 = arith.constant 0 : index
    %6 = vector.load %arg2[%c0_6, %c0_7] : memref<8x256xf32, #tpu.memory_space<vmem>>, vector<8x128xf32>
    %c0_8 = arith.constant 0 : index
    %c0_9 = arith.constant 0 : index
    %7 = vector.load %arg3[%c0_8, %c0_9] : memref<8x256xf32, #tpu.memory_space<vmem>>, vector<8x128xf32>
    %8 = math.absf %6 : vector<8x128xf32>
    %cst = arith.constant 0.000000e+00 : f32
    %9 = vector.broadcast %cst : f32 to vector<8x128xf32>
    %10 = arith.subf %9, %8 : vector<8x128xf32>
    %11 = math.exp %10 : vector<8x128xf32>
    %cst_10 = arith.constant 0.000000e+00 : f32
    %12 = vector.broadcast %cst_10 : f32 to vector<8x128xf32>
    %13 = arith.maximumf %6, %12 : vector<8x128xf32>
    %14 = arith.mulf %6, %7 : vector<8x128xf32>
    %15 = arith.subf %13, %14 : vector<8x128xf32>
    %16 = math.log1p %11 : vector<8x128xf32>
    %17 = arith.addf %15, %16 : vector<8x128xf32>
    %cst_11 = arith.constant 1.000000e+00 : f32
    %18 = vector.broadcast %cst_11 : f32 to vector<8x128xf32>
    %19 = arith.addf %18, %11 : vector<8x128xf32>
    %cst_12 = arith.constant 1.000000e+00 : f32
    %20 = vector.broadcast %cst_12 : f32 to vector<8x128xf32>
    %21 = arith.divf %20, %19 : vector<8x128xf32>
    %cst_13 = arith.constant 0.000000e+00 : f32
    %22 = vector.broadcast %cst_13 : f32 to vector<8x128xf32>
    %23 = arith.cmpf oge, %6, %22 : vector<8x128xf32>
    %24 = arith.mulf %11, %21 : vector<8x128xf32>
    %25 = arith.select %23, %21, %24 : vector<8x128xi1>, vector<8x128xf32>
    %cst_14 = arith.constant 0.000000e+00 : f32
    %26 = vector.broadcast %cst_14 : f32 to vector<8x128xf32>
    %27 = arith.subf %26, %25 : vector<8x128xf32>
    %28 = math.exp %27 : vector<8x128xf32>
    %cst_15 = arith.constant 1.000000e+00 : f32
    %29 = vector.broadcast %cst_15 : f32 to vector<8x128xf32>
    %30 = arith.addf %29, %28 : vector<8x128xf32>
    %cst_16 = arith.constant 1.000000e+00 : f32
    %31 = vector.broadcast %cst_16 : f32 to vector<8x128xf32>
    %32 = arith.divf %31, %30 : vector<8x128xf32>
    %33 = arith.mulf %32, %7 : vector<8x128xf32>
    %34 = arith.addf %32, %7 : vector<8x128xf32>
    %35 = arith.addf %3, %17 : vector<8x128xf32>
    %36 = arith.addf %4, %33 : vector<8x128xf32>
    %37 = arith.addf %5, %34 : vector<8x128xf32>
    %c0_17 = arith.constant 0 : index
    %c128 = arith.constant 128 : index
    %38 = vector.load %arg2[%c0_17, %c128] : memref<8x256xf32, #tpu.memory_space<vmem>>, vector<8x128xf32>
    %c0_18 = arith.constant 0 : index
    %c128_19 = arith.constant 128 : index
    %39 = vector.load %arg3[%c0_18, %c128_19] : memref<8x256xf32, #tpu.memory_space<vmem>>, vector<8x128xf32>
    %40 = math.absf %38 : vector<8x128xf32>
    %cst_20 = arith.constant 0.000000e+00 : f32
    %41 = vector.broadcast %cst_20 : f32 to vector<8x128xf32>
    %42 = arith.subf %41, %40 : vector<8x128xf32>
    %43 = math.exp %42 : vector<8x128xf32>
    %cst_21 = arith.constant 0.000000e+00 : f32
    %44 = vector.broadcast %cst_21 : f32 to vector<8x128xf32>
    %45 = arith.maximumf %38, %44 : vector<8x128xf32>
    %46 = arith.mulf %38, %39 : vector<8x128xf32>
    %47 = arith.subf %45, %46 : vector<8x128xf32>
    %48 = math.log1p %43 : vector<8x128xf32>
    %49 = arith.addf %47, %48 : vector<8x128xf32>
    %cst_22 = arith.constant 1.000000e+00 : f32
    %50 = vector.broadcast %cst_22 : f32 to vector<8x128xf32>
    %51 = arith.addf %50, %43 : vector<8x128xf32>
    %cst_23 = arith.constant 1.000000e+00 : f32
    %52 = vector.broadcast %cst_23 : f32 to vector<8x128xf32>
    %53 = arith.divf %52, %51 : vector<8x128xf32>
    %cst_24 = arith.constant 0.000000e+00 : f32
    %54 = vector.broadcast %cst_24 : f32 to vector<8x128xf32>
    %55 = arith.cmpf oge, %38, %54 : vector<8x128xf32>
    %56 = arith.mulf %43, %53 : vector<8x128xf32>
    %57 = arith.select %55, %53, %56 : vector<8x128xi1>, vector<8x128xf32>
    %cst_25 = arith.constant 0.000000e+00 : f32
    %58 = vector.broadcast %cst_25 : f32 to vector<8x128xf32>
    %59 = arith.subf %58, %57 : vector<8x128xf32>
    %60 = math.exp %59 : vector<8x128xf32>
    %cst_26 = arith.constant 1.000000e+00 : f32
    %61 = vector.broadcast %cst_26 : f32 to vector<8x128xf32>
    %62 = arith.addf %61, %60 : vector<8x128xf32>
    %cst_27 = arith.constant 1.000000e+00 : f32
    %63 = vector.broadcast %cst_27 : f32 to vector<8x128xf32>
    %64 = arith.divf %63, %62 : vector<8x128xf32>
    %65 = arith.mulf %64, %39 : vector<8x128xf32>
    %66 = arith.addf %64, %39 : vector<8x128xf32>
    %67 = arith.addf %35, %49 : vector<8x128xf32>
    %68 = arith.addf %36, %65 : vector<8x128xf32>
    %69 = arith.addf %37, %66 : vector<8x128xf32>
    %c0_28 = arith.constant 0 : index
    %c0_29 = arith.constant 0 : index
    %70 = vector.load %arg7[%c0_28, %c0_29] : memref<8x128xf32, #tpu.memory_space<vmem>>, vector<8x128xf32>
    tpu.vector_store %arg7[%c0_28, %c0_29], %67 {strides = array<i32>} : memref<8x128xf32, #tpu.memory_space<vmem>>, vector<8x128xf32>,
    %c0_30 = arith.constant 0 : index
    %c0_31 = arith.constant 0 : index
    %71 = vector.load %arg8[%c0_30, %c0_31] : memref<8x128xf32, #tpu.memory_space<vmem>>, vector<8x128xf32>
    tpu.vector_store %arg8[%c0_30, %c0_31], %68 {strides = array<i32>} : memref<8x128xf32, #tpu.memory_space<vmem>>, vector<8x128xf32>,
    %c0_32 = arith.constant 0 : index
    %c0_33 = arith.constant 0 : index
    %72 = vector.load %arg9[%c0_32, %c0_33] : memref<8x128xf32, #tpu.memory_space<vmem>>, vector<8x128xf32>
    tpu.vector_store %arg9[%c0_32, %c0_33], %69 {strides = array<i32>} : memref<8x128xf32, #tpu.memory_space<vmem>>, vector<8x128xf32>,
    %c0_i32_34 = arith.constant 0 : i32
    %73 = arith.cmpi eq, %arg1, %c0_i32_34 : i32
    %74 = arith.extui %73 : i1 to i32
    %c0_i32_35 = arith.constant 0 : i32
    %75 = arith.cmpi ne, %74, %c0_i32_35 : i32
    scf.if %75 {
      %c0_36 = arith.constant 0 : index
      %c0_37 = arith.constant 0 : index
      %76 = vector.load %arg7[%c0_36, %c0_37] : memref<8x128xf32, #tpu.memory_space<vmem>>, vector<8x128xf32>
      %c0_38 = arith.constant 0 : index
      %c0_39 = arith.constant 0 : index
      %77 = vector.load %arg4[%c0_38, %c0_39] : memref<8x128xf32, #tpu.memory_space<vmem>>, vector<8x128xf32>
      tpu.vector_store %arg4[%c0_38, %c0_39], %76 {strides = array<i32>} : memref<8x128xf32, #tpu.memory_space<vmem>>, vector<8x128xf32>,
      %c0_40 = arith.constant 0 : index
      %c0_41 = arith.constant 0 : index
      %78 = vector.load %arg8[%c0_40, %c0_41] : memref<8x128xf32, #tpu.memory_space<vmem>>, vector<8x128xf32>
      %c0_42 = arith.constant 0 : index
      %c0_43 = arith.constant 0 : index
      %79 = vector.load %arg5[%c0_42, %c0_43] : memref<8x128xf32, #tpu.memory_space<vmem>>, vector<8x128xf32>
      tpu.vector_store %arg5[%c0_42, %c0_43], %78 {strides = array<i32>} : memref<8x128xf32, #tpu.memory_space<vmem>>, vector<8x128xf32>,
      %c0_44 = arith.constant 0 : index
      %c0_45 = arith.constant 0 : index
      %80 = vector.load %arg9[%c0_44, %c0_45] : memref<8x128xf32, #tpu.memory_space<vmem>>, vector<8x128xf32>
      %c0_46 = arith.constant 0 : index
      %c0_47 = arith.constant 0 : index
      %81 = vector.load %arg6[%c0_46, %c0_47] : memref<8x128xf32, #tpu.memory_space<vmem>>, vector<8x128xf32>
      tpu.vector_store %arg6[%c0_46, %c0_47], %80 {strides = array<i32>} : memref<8x128xf32, #tpu.memory_space<vmem>>, vector<8x128xf32>,
    } else {
    }
    return
  }
  func.func @transform_0(%arg0: i32, %arg1: i32) -> (i32, i32) {
    %c0_i32 = arith.constant 0 : i32
    return %arg0, %arg1 : i32, i32
  }
  func.func @transform_1(%arg0: i32, %arg1: i32) -> (i32, i32) {
    %c0_i32 = arith.constant 0 : i32
    return %arg0, %arg1 : i32, i32
  }
  func.func @transform_2(%arg0: i32, %arg1: i32) -> (i32, i32) {
    %c0_i32 = arith.constant 0 : i32
    %c0_i32_0 = arith.constant 0 : i32
    return %arg0, %c0_i32 : i32, i32
  }
  func.func @transform_3(%arg0: i32, %arg1: i32) -> (i32, i32) {
    %c0_i32 = arith.constant 0 : i32
    %c0_i32_0 = arith.constant 0 : i32
    return %arg0, %c0_i32 : i32, i32
  }
  func.func @transform_4(%arg0: i32, %arg1: i32) -> (i32, i32) {
    %c0_i32 = arith.constant 0 : i32
    %c0_i32_0 = arith.constant 0 : i32
    return %arg0, %c0_i32 : i32, i32
  }
}

</mosaic_0001>

<llo_original>
// kernel: tpu_custom_call.1
$region0: #{tpu_custom_call.1}
  #allocation0 [shape = 'u32[]', space=smem, size = 0x4, offset = 0x4, fixed_abs, tag = 'smem constant byte address 0x4 - core index']
  #allocation1 [shape = 'u32[72,128]{1,0:T(1,128)}', space=vmem, size = 0x9000, scoped, tag = 'internal scratch']
  #allocation2 [shape = 'f32[8,128]{1,0:T(8,128)}', space=vmem, size = 0x1000, scoped, tag = 'scratch operand']
  #allocation3 [shape = 'f32[8,128]{1,0:T(8,128)}', space=vmem, size = 0x1000, scoped, tag = 'scratch operand']
  #allocation4 [shape = 'f32[8,128]{1,0:T(8,128)}', space=vmem, size = 0x1000, scoped, tag = 'scratch operand']
  %s0 = inlined_call_operand.hbm [shape: f32[8,256], index: 0, kind: input, shape index: {}]
  %s1 = inlined_call_operand.hbm [shape: f32[8,256], index: 1, kind: input, shape index: {}]
  %s2 = inlined_call_operand.hbm [shape: f32[8,128], index: 2, kind: output, shape index: {0}]
  %s3 = inlined_call_operand.hbm [shape: f32[8,128], index: 3, kind: output, shape index: {1}]
  %s4 = inlined_call_operand.hbm [shape: f32[8,128], index: 4, kind: output, shape index: {2}]
  %5 = xla_tuple %s2, %s3, %s4
  %s6 = sld [smem:[#allocation0]]
  $region50: #{tpu_custom_call.1} parent=0
    _
  %s8 = ssub.s32 1, %s6
  %s9 = scalar_select 0, %s8, %s6
  $region1: #{tpu_custom_call.1} parent=0
    #allocation5 [shape = 'u8[8192]{0}', space=vmem, size = 0x2000, scoped, tag = 'input window, operand 0, single buffered']
    #allocation6 [shape = 's32[1]{0}', space=sflag, size = 0x4, scoped, tag = 'scoped memory for tpu_custom_call.1']
    #allocation7 [shape = 's32[1]{0}', space=sflag, size = 0x4, scoped, tag = 'scoped memory for tpu_custom_call.1']
    #allocation8 [shape = 'u8[8192]{0}', space=vmem, size = 0x2000, scoped, tag = 'input window, operand 1, single buffered']
    #allocation9 [shape = 's32[1]{0}', space=sflag, size = 0x4, scoped, tag = 'scoped memory for tpu_custom_call.1']
    #allocation10 [shape = 'u8[4096]{0}', space=vmem, size = 0x1000, scoped, tag = 'output window, operand 0, single buffered']
    #allocation11 [shape = 'u8[4096]{0}', space=vmem, size = 0x1000, scoped, tag = 'output window, operand 1, single buffered']
    #allocation12 [shape = 's32[1]{0}', space=sflag, size = 0x4, scoped, tag = 'scoped memory for tpu_custom_call.1']
    #allocation13 [shape = 'u8[4096]{0}', space=vmem, size = 0x1000, scoped, tag = 'output window, operand 2, single buffered']
    %10 = vsyncpa [#allocation6], 0
    %11 = vsyncpa [#allocation9], 0
    %12 = vsyncpa [#allocation7], 0
    %13 = vsyncpa [#allocation12], 0
    // Predicated region
    $region2: #{tpu_custom_call.1} parent=1 // pred_check
      _
    $region3: #{tpu_custom_call.1} parent=1 // pred_check_branch
      %15 = sbr.rel (0) target = $region5
    $region4: #{tpu_custom_call.1} parent=1 // pred_region
      %17 = vsyncadd [#allocation6], 0
      %s19 = sshll.u32 %s0, 4
      %s20 = int_to_ptr.hbm [resolvable:$true] %s19
      %s21 = sshll.u32 [#allocation5], 4
      %s22 = int_to_ptr.vmem [resolvable:$true] %s21
      %24 = dma.hbm_to_vmem [thread:$0]  %s20, 256, %s22, [#allocation6]
    $region5: #{tpu_custom_call.1} parent=1 // pred_fallthru
      _
    // Predicated region
    $region6: #{tpu_custom_call.1} parent=1 // pred_check
      _
    $region7: #{tpu_custom_call.1} parent=1 // pred_check_branch
      %26 = sbr.rel (0) target = $region9
    $region8: #{tpu_custom_call.1} parent=1 // pred_region
      %28 = vsyncadd [#allocation9], 0
      %s30 = sshll.u32 %s1, 4
      %s31 = int_to_ptr.hbm [resolvable:$true] %s30
      %s32 = sshll.u32 [#allocation8], 4
      %s33 = int_to_ptr.vmem [resolvable:$true] %s32
      %35 = dma.hbm_to_vmem [thread:$0]  %s31, 256, %s33, [#allocation9]
    $region9: #{tpu_custom_call.1} parent=1 // pred_fallthru
      _
    // Predicated region
    $region10: #{tpu_custom_call.1} parent=1 // pred_check
      _
    $region11: #{tpu_custom_call.1} parent=1 // pred_check_branch
      %37 = sbr.rel (0) target = $region13
    $region12: #{tpu_custom_call.1} parent=1 // pred_region
      %39 = dma.done [#allocation6], 256
    $region13: #{tpu_custom_call.1} parent=1 // pred_fallthru
      _
    // Predicated region
    $region14: #{tpu_custom_call.1} parent=1 // pred_check
      _
    $region15: #{tpu_custom_call.1} parent=1 // pred_check_branch
      %41 = sbr.rel (0) target = $region17
    $region16: #{tpu_custom_call.1} parent=1 // pred_region
      %43 = dma.done [#allocation9], 256
    $region17: #{tpu_custom_call.1} parent=1 // pred_fallthru
      _
    %p44 = scmp.eq.s32.totalorder 0, 0
    // Predicated region
    $region18: #{tpu_custom_call.1} parent=1 // pred_check
      %p45 = pneg %p44
    $region19: #{tpu_custom_call.1} parent=1 // pred_check_branch
      %47 = sbr.rel (%p45) target = $region21
    $region20: #{tpu_custom_call.1} parent=1 // pred_region
      %48 = vst [vmem:[#allocation2] sm:$0xff] 0.0
      %49 = vst [vmem:[#allocation3] sm:$0xff] 0.0
      %50 = vst [vmem:[#allocation4] sm:$0xff] 0.0
    $region21: #{tpu_custom_call.1} parent=1 // pred_fallthru
      _
    %v51 = vld [vmem:[#allocation2] sm:$0xff]
    %v52 = vld [vmem:[#allocation3] sm:$0xff]
    %v53 = vld [vmem:[#allocation4] sm:$0xff]
    %v54 = vld [vmem:[#allocation5] sm:$0xff]
    %v55 = vld [vmem:[#allocation8] sm:$0xff]
    %v56 = vand.u32 2147483647, %v54
    %v57 = vsub.f32 0.0, %v56
    %v58 = vmul.f32 %v57, 1.442695
    %v59 = vpow.pop %v58
    %v60 = vmax.f32 %v54, 0.0
    %v61 = vmul.f32 %v54, %v55
    %v62 = vsub.f32 %v60, %v61
    %v63 = vadd.f32 %v59, 1.0
    %v64 = vlog2.pop %v63
    %v65 = vmul.f32 %v64, 0.6931472
    %v66 = vmul.f32 -0.5, %v59
    %v67 = vadd.f32 %v66, 1.0
    %v68 = vmul.f32 %v67, %v59
    %v69 = vand.u32 2147483647, %v59
    %vm70 = vcmp.lt.f32.partialorder %v69, 0.0004427343
    %v71 = vsel %vm70, %v68, %v65
    %v72 = vadd.f32 %v62, %v71
    %v73 = vadd.f32 %v59, 1.0
    %v74 = vrcp.pop %v73
    %v75 = vmul.f32 %v73, %v74
    %v76 = vsub.f32 1.0, %v75
    %v77 = vmul.f32 %v74, %v76
    %v78 = vadd.f32 %v74, %v77
    %vm79 = vweird.f32 %v73
    %vm80 = vweird.f32 %v74
    %vm81 = vmor %vm79, %vm80
    %v82 = vsel %vm81, %v74, %v78
    %v83 = vand.u32 2147483647, %v73
    %vm84 = vcmp.eq.f32.partialorder %v83, 8.507059e+37
    %v85 = vand.u32 %v73, 2147483648
    %v86 = vor.u32 1.1754944e-38, %v85
    %v87 = vsel %vm84, %v86, %v82
    %v88 = vmul.f32 1.0, %v87
    %vm89 = vcmp.ge.f32.partialorder %v54, 0.0
    %v90 = vmul.f32 %v59, %v88
    %v91 = vsel %vm89, %v88, %v90
    %v92 = vsub.f32 0.0, %v91
    %v93 = vmul.f32 %v92, 1.442695
    %v94 = vpow.pop %v93
    %v95 = vadd.f32 %v94, 1.0
    %v96 = vrcp.pop %v95
    %v97 = vmul.f32 %v95, %v96
    %v98 = vsub.f32 1.0, %v97
    %v99 = vmul.f32 %v96, %v98
    %v100 = vadd.f32 %v96, %v99
    %vm101 = vweird.f32 %v95
    %vm102 = vweird.f32 %v96
    %vm103 = vmor %vm101, %vm102
    %v104 = vsel %vm103, %v96, %v100
    %v105 = vand.u32 2147483647, %v95
    %vm106 = vcmp.eq.f32.partialorder %v105, 8.507059e+37
    %v107 = vand.u32 %v95, 2147483648
    %v108 = vor.u32 1.1754944e-38, %v107
    %v109 = vsel %vm106, %v108, %v104
    %v110 = vmul.f32 1.0, %v109
    %v111 = vmul.f32 %v110, %v55
    %v112 = vadd.f32 %v110, %v55
    %v113 = vadd.f32 %v51, %v72
    %v114 = vadd.f32 %v52, %v111
    %v115 = vadd.f32 %v53, %v112
    %v116 = vld [vmem:[#allocation5 + $0x8] sm:$0xff]
    %v117 = vld [vmem:[#allocation8 + $0x8] sm:$0xff]
    %v118 = vand.u32 2147483647, %v116
    %v119 = vsub.f32 0.0, %v118
    %v120 = vmul.f32 %v119, 1.442695
    %v121 = vpow.pop %v120
    %v122 = vmax.f32 %v116, 0.0
    %v123 = vmul.f32 %v116, %v117
    %v124 = vsub.f32 %v122, %v123
    %v125 = vadd.f32 %v121, 1.0
    %v126 = vlog2.pop %v125
    %v127 = vmul.f32 %v126, 0.6931472
    %v128 = vmul.f32 -0.5, %v121
    %v129 = vadd.f32 %v128, 1.0
    %v130 = vmul.f32 %v129, %v121
    %v131 = vand.u32 2147483647, %v121
    %vm132 = vcmp.lt.f32.partialorder %v131, 0.0004427343
    %v133 = vsel %vm132, %v130, %v127
    %v134 = vadd.f32 %v124, %v133
    %v135 = vadd.f32 %v121, 1.0
    %v136 = vrcp.pop %v135
    %v137 = vmul.f32 %v135, %v136
    %v138 = vsub.f32 1.0, %v137
    %v139 = vmul.f32 %v136, %v138
    %v140 = vadd.f32 %v136, %v139
    %vm141 = vweird.f32 %v135
    %vm142 = vweird.f32 %v136
    %vm143 = vmor %vm141, %vm142
    %v144 = vsel %vm143, %v136, %v140
    %v145 = vand.u32 2147483647, %v135
    %vm146 = vcmp.eq.f32.partialorder %v145, 8.507059e+37
    %v147 = vand.u32 %v135, 2147483648
    %v148 = vor.u32 1.1754944e-38, %v147
    %v149 = vsel %vm146, %v148, %v144
    %v150 = vmul.f32 1.0, %v149
    %vm151 = vcmp.ge.f32.partialorder %v116, 0.0
    %v152 = vmul.f32 %v121, %v150
    %v153 = vsel %vm151, %v150, %v152
    %v154 = vsub.f32 0.0, %v153
    %v155 = vmul.f32 %v154, 1.442695
    %v156 = vpow.pop %v155
    %v157 = vadd.f32 %v156, 1.0
    %v158 = vrcp.pop %v157
    %v159 = vmul.f32 %v157, %v158
    %v160 = vsub.f32 1.0, %v159
    %v161 = vmul.f32 %v158, %v160
    %v162 = vadd.f32 %v158, %v161
    %vm163 = vweird.f32 %v157
    %vm164 = vweird.f32 %v158
    %vm165 = vmor %vm163, %vm164
    %v166 = vsel %vm165, %v158, %v162
    %v167 = vand.u32 2147483647, %v157
    %vm168 = vcmp.eq.f32.partialorder %v167, 8.507059e+37
    %v169 = vand.u32 %v157, 2147483648
    %v170 = vor.u32 1.1754944e-38, %v169
    %v171 = vsel %vm168, %v170, %v166
    %v172 = vmul.f32 1.0, %v171
    %v173 = vmul.f32 %v172, %v117
    %v174 = vadd.f32 %v172, %v117
    %v175 = vadd.f32 %v113, %v134
    %v176 = vadd.f32 %v114, %v173
    %v177 = vadd.f32 %v115, %v174
    %178 = vst [vmem:[#allocation2] sm:$0xff] %v175
    %179 = vst [vmem:[#allocation3] sm:$0xff] %v176
    %180 = vst [vmem:[#allocation4] sm:$0xff] %v177
    // Predicated region
    $region22: #{tpu_custom_call.1} parent=1 // pred_check
      %p181 = pneg %p44
    $region23: #{tpu_custom_call.1} parent=1 // pred_check_branch
      %183 = sbr.rel (%p181) target = $region25
    $region24: #{tpu_custom_call.1} parent=1 // pred_region
      %v184 = vld [vmem:[#allocation2] sm:$0xff]
      %185 = vst [vmem:[#allocation10] sm:$0xff] %v184
      %v186 = vld [vmem:[#allocation3] sm:$0xff]
      %187 = vst [vmem:[#allocation11] sm:$0xff] %v186
      %v188 = vld [vmem:[#allocation4] sm:$0xff]
      %189 = vst [vmem:[#allocation13] sm:$0xff] %v188
    $region25: #{tpu_custom_call.1} parent=1 // pred_fallthru
      _
    // Predicated region
    $region26: #{tpu_custom_call.1} parent=1 // pred_check
      _
    $region27: #{tpu_custom_call.1} parent=1 // pred_check_branch
      %191 = sbr.rel (0) target = $region29
    $region28: #{tpu_custom_call.1} parent=1 // pred_region
      %193 = vsyncadd [#allocation7], 0
      %s195 = sshll.u32 [#allocation10], 4
      %s196 = int_to_ptr.vmem [resolvable:$true] %s195
      %s197 = sshll.u32 %s2, 4
      %s198 = int_to_ptr.hbm [resolvable:$true] %s197
      %200 = dma.vmem_to_hbm [thread:$0]  %s196, 128, %s198, [#allocation7]
    $region29: #{tpu_custom_call.1} parent=1 // pred_fallthru
      _
    // Predicated region
    $region30: #{tpu_custom_call.1} parent=1 // pred_check
      _
    $region31: #{tpu_custom_call.1} parent=1 // pred_check_branch
      %202 = sbr.rel (0) target = $region33
    $region32: #{tpu_custom_call.1} parent=1 // pred_region
      %204 = vsyncadd [#allocation12], 0
      %s206 = sshll.u32 [#allocation11], 4
      %s207 = int_to_ptr.vmem [resolvable:$true] %s206
      %s208 = sshll.u32 %s3, 4
      %s209 = int_to_ptr.hbm [resolvable:$true] %s208
      %211 = dma.vmem_to_hbm [thread:$0]  %s207, 128, %s209, [#allocation12]
    $region33: #{tpu_custom_call.1} parent=1 // pred_fallthru
      _
    // Predicated region
    $region34: #{tpu_custom_call.1} parent=1 // pred_check
      _
    $region35: #{tpu_custom_call.1} parent=1 // pred_check_branch
      %213 = sbr.rel (0) target = $region37
    $region36: #{tpu_custom_call.1} parent=1 // pred_region
      %215 = vsyncadd [#allocation12], 0
      %s217 = sshll.u32 [#allocation13], 4
      %s218 = int_to_ptr.vmem [resolvable:$true] %s217
      %s219 = sshll.u32 %s4, 4
      %s220 = int_to_ptr.hbm [resolvable:$true] %s219
      %222 = dma.vmem_to_hbm [thread:$0]  %s218, 128, %s220, [#allocation12]
    $region37: #{tpu_custom_call.1} parent=1 // pred_fallthru
      _
    // Predicated region
    $region38: #{tpu_custom_call.1} parent=1 // pred_check
      _
    $region39: #{tpu_custom_call.1} parent=1 // pred_check_branch
      %224 = sbr.rel (0) target = $region41
    $region40: #{tpu_custom_call.1} parent=1 // pred_region
      %226 = dma.done [#allocation7], 128
    $region41: #{tpu_custom_call.1} parent=1 // pred_fallthru
      _
    // Predicated region
    $region42: #{tpu_custom_call.1} parent=1 // pred_check
      _
    $region43: #{tpu_custom_call.1} parent=1 // pred_check_branch
      %228 = sbr.rel (0) target = $region45
    $region44: #{tpu_custom_call.1} parent=1 // pred_region
      %230 = dma.done [#allocation12], 128
    $region45: #{tpu_custom_call.1} parent=1 // pred_fallthru
      _
    // Predicated region
    $region46: #{tpu_custom_call.1} parent=1 // pred_check
      _
    $region47: #{tpu_custom_call.1} parent=1 // pred_check_branch
      %232 = sbr.rel (0) target = $region49
    $region48: #{tpu_custom_call.1} parent=1 // pred_region
      %234 = dma.done [#allocation12], 128
    $region49: #{tpu_custom_call.1} parent=1 // pred_fallthru
      _
    %235 = vsyncpa [#allocation6], 1
    %236 = vsyncpa [#allocation9], 1
    %237 = vsyncpa [#allocation7], 1
    %238 = vsyncpa [#allocation12], 1

</llo_original>
